<compile_context>
chip_gen: v5e
topology: v5e:2x2
jax: 0.10.0
libtpu: 0.0.40
codegen_flags: <defaults>
</compile_context>

<pallas_src>
import functools
import math

import jax
import jax.numpy as jnp
from jax.experimental import pallas as pl
from jax.experimental.pallas import tpu as pltpu


# ---------------------------------------------------------------------------
# Init-time parameter construction (mirrors FourierPreprocessor.__init__)
# ---------------------------------------------------------------------------
def build_positions(spatial_shape, start=-1.0, end=1.0):
    """meshgrid coordinates, shape (*swapped_spatial, d), indexing='xy'
    (matches torch.meshgrid(..., indexing='xy') semantics exactly)."""
    axes = [jnp.linspace(start, end, s, dtype=jnp.float32) for s in spatial_shape]
    grids = jnp.meshgrid(*axes, indexing="xy")
    return jnp.stack(grids, axis=len(spatial_shape))


def build_fourier_params(in_shape, num_freq_bands, max_reso=None, cat_pos=True):
    """Returns (pos_encoding, out_dim):
      pos_encoding: (N, E) with E = d*(2*num_freq_bands + cat_pos),
                    columns = [pos | sin(pi*pos_freqs) | cos(pi*pos_freqs)],
                    pos_freqs ordered d-major / f-minor (== torch rearrange
                    'd ... f -> ... (d f)').
      out_dim = C + E.
    All sin/cos happens here, once, exactly like the PyTorch __init__."""
    *spatial_shape, num_c = in_shape
    pos = build_positions(spatial_shape)                       # (..., d)
    d = pos.shape[-1]
    max_reso = max_reso or pos.shape[:-1]
    freq_bands = jnp.stack(
        [jnp.linspace(1.0, r / 2.0, num_freq_bands, dtype=jnp.float32) for r in max_reso]
    )                                                          # (d, F)
    pos_freqs = jnp.einsum("...d,df->...df", pos, freq_bands)  # (..., d, F)
    N = math.prod(spatial_shape)
    pos_flat = pos.reshape(N, d)                               # (N, d)
    pf_flat = pos_freqs.reshape(N, d * num_freq_bands)         # (N, d*F), d-major
    encs = [pos_flat] if cat_pos else []
    encs += [jnp.sin(jnp.pi * pf_flat), jnp.cos(jnp.pi * pf_flat)]
    pos_encoding = jnp.concatenate(encs, axis=-1)              # (N, E)
    out_dim = num_c + pos_encoding.shape[-1]
    return pos_encoding, out_dim


def pad_encoding(pos_encoding, num_c, dtype):
    """Init-time: place the (N, E) encoding at column offset num_c inside a
    zero-padded (N, num_c + E) slab, cast to the model dtype."""
    return jnp.pad(pos_encoding.astype(dtype), ((0, 0), (num_c, 0)))


# ---------------------------------------------------------------------------
# Pallas kernel: forward pass (pure copy/concat, HBM-bandwidth bound)
# ---------------------------------------------------------------------------
def _fourier_prep_kernel(x_ref, enc_ref, out_ref, *, C):
    # x_ref:   (TB, TN, C)         N-tile of TB batch elements
    # enc_ref: (TN, out_dim)       pre-padded encoding tile (zeros in [:, :C])
    # out_ref: (TB, TN, out_dim)
    # 1) full-tile store of the encoding slab (lane-dense, no rotate),
    # 2) overwrite the first C channels with x (lane-offset-0 store).
    out_ref[...] = jnp.broadcast_to(enc_ref[...][None], out_ref.shape)
    out_ref[:, :, :C] = x_ref[...]


def _round_up(v, m):
    return ((v + m - 1) // m) * m


def _pick_tiles(B, N, C, out_dim, dtype, *, vmem_budget_bytes, max_tile_n=8192,
                max_tile_b=8):
    """Choose (TB, TN) from a lane-padded, double-buffered VMEM byte budget."""
    itemsize = jnp.dtype(dtype).itemsize
    # dtype-aware sublane granularity for the second-to-last block dim
    granule = {4: 8, 2: 16, 1: 32}.get(itemsize, 8)

    TB = min(B, max_tile_b)

    # per-N-row pipeline footprint: x + enc + out blocks, lane-padded to 128,
    # times 2 for double buffering.
    lanes_c = _round_up(C, 128)
    lanes_o = _round_up(out_dim, 128)
    bytes_per_row = 2 * itemsize * (TB * lanes_c + lanes_o + TB * lanes_o)

    tn = max(granule, (vmem_budget_bytes // bytes_per_row) // granule * granule)
    tn = min(tn, max_tile_n)

    if tn >= N:
        if N > granule:
            # keep >= 2 n-tiles so v7x megacore can split on the n axis
            tn = _round_up(pl.cdiv(N, 2), granule)
        else:
            tn = N                       # tiny N: full-extent block is legal
    else:
        # rebalance: same tile count, but avoid a tiny ragged tail
        n_tiles = pl.cdiv(N, tn)
        tn = _round_up(pl.cdiv(N, n_tiles), granule)
    return TB, tn


def fourier_preprocess(x, enc_pad, *, tile_n=None, tile_b=None,
                       vmem_budget_bytes=24 << 20, vmem_limit_bytes=32 << 20):
    """x: (B, *spatial, C), enc_pad: (N, out_dim) pre-padded encoding
    -> (B, N, out_dim) with out[..., :C] = x, out[..., C:] = pos_encoding."""
    B = x.shape[0]
    spatial = x.shape[1:-1]
    C = x.shape[-1]
    N = math.prod(spatial)
    out_dim = enc_pad.shape[-1]
    assert enc_pad.shape[0] == N, (enc_pad.shape, N)
    assert enc_pad.dtype == x.dtype, (enc_pad.dtype, x.dtype)
    assert out_dim > C

    x_flat = x.reshape(B, N, C)

    TB_auto, TN_auto = _pick_tiles(B, N, C, out_dim, x.dtype,
                                   vmem_budget_bytes=vmem_budget_bytes)
    TB = min(tile_b, B) if tile_b is not None else TB_auto
    TN = min(tile_n, N) if tile_n is not None else TN_auto

    num_n_tiles = pl.cdiv(N, TN)
    num_b_tiles = pl.cdiv(B, TB)

    kernel = functools.partial(_fourier_prep_kernel, C=C)

    itemsize = jnp.dtype(x.dtype).itemsize
    bytes_accessed = (B * N * C + N * out_dim + B * N * out_dim) * itemsize

    return pl.pallas_call(
        kernel,
        out_shape=jax.ShapeDtypeStruct((B, N, out_dim), x.dtype),
        # b innermost: enc tile's block index is constant across consecutive
        # b steps, so its DMA is issued once per n-tile, not once per (n, b).
        grid=(num_n_tiles, num_b_tiles),
        in_specs=[
            pl.BlockSpec((TB, TN, C), lambda n, b: (b, n, 0)),
            pl.BlockSpec((TN, out_dim), lambda n, b: (n, 0)),
        ],
        out_specs=pl.BlockSpec((TB, TN, out_dim), lambda n, b: (b, n, 0)),
        compiler_params=pltpu.CompilerParams(
            # split on n for v7x megacore; keep b "arbitrary" so the split does
            # not land on b (which would duplicate the enc DMA per core).
            dimension_semantics=("parallel", "arbitrary"),
            vmem_limit_bytes=vmem_limit_bytes,
        ),
        cost_estimate=pl.CostEstimate(
            flops=0, transcendentals=0, bytes_accessed=int(bytes_accessed)),
    )(x_flat, enc_pad)


# ---------------------------------------------------------------------------
# Pure-JAX reference for validation
# ---------------------------------------------------------------------------
def fourier_preprocess_ref(x, pos_encoding):
    B = x.shape[0]
    N = pos_encoding.shape[0]
    C = x.shape[-1]
    x_flat = x.reshape(B, N, C)
    enc = pos_encoding.astype(x.dtype)
    enc_b = jnp.broadcast_to(enc[None], (B,) + enc.shape)
    return jnp.concatenate([x_flat, enc_b], axis=-1)


if __name__ == "__main__":
    # small shapes consistent with the module: image (16, 16, 4), 8 freq bands
    in_shape = [16, 16, 4]
    num_freq_bands = 8
    batch = 2
    C = in_shape[-1]
    d = len(in_shape) - 1
    N = math.prod(in_shape[:-1])

    # ---- init-time (== nn.Module.__init__): build + pre-pad the encoding ----
    pos_encoding, out_dim = build_fourier_params(in_shape, num_freq_bands)
    assert out_dim == C + d * (2 * num_freq_bands + 1)          # 4 + 34 = 38
    assert pos_encoding.shape == (N, d * (2 * num_freq_bands + 1))

    key = jax.random.PRNGKey(0)
    x = jax.random.uniform(key, (batch, *in_shape), dtype=jnp.float32)
    enc_pad = pad_encoding(pos_encoding, C, x.dtype)             # (N, out_dim)

    ref = fourier_preprocess_ref(x, pos_encoding)

    # ---- forward with auto-picked tiles (batch folded into the block) ----
    out = fourier_preprocess(x, enc_pad)
    out = jax.block_until_ready(out)
    assert out.shape == (batch, N, out_dim), out.shape
    assert jnp.allclose(out, ref, atol=1e-6, rtol=1e-6), \
        float(jnp.abs(out - ref).max())

    # ---- exercise ragged N-tiles and b-tiling (masked boundary blocks) ----
    out2 = fourier_preprocess(x, enc_pad, tile_n=96, tile_b=1)
    out2 = jax.block_until_ready(out2)
    assert jnp.allclose(out2, ref, atol=1e-6, rtol=1e-6), \
        float(jnp.abs(out2 - ref).max())

    print("KERNEL_OK")
</pallas_src>

<mosaic_0001>
module attributes {stable_mosaic.version = 11 : i64} {
  func.func @_fourier_prep_kernel(%arg0: i32, %arg1: i32, %arg2: memref<2x128x4xf32, #tpu.memory_space<vmem>>, %arg3: memref<128x38xf32, #tpu.memory_space<vmem>>, %arg4: memref<2x128x38xf32, #tpu.memory_space<vmem>>) attributes {dimension_semantics = [#tpu.dimension_semantics<parallel>, #tpu.dimension_semantics<arbitrary>], iteration_bounds = array<i64: 2, 1>, scalar_prefetch = 0 : i64, scratch_operands = 0 : i64, tpu.core_type = #tpu.core_type<tc>, window_params = [{transform_indices = @transform_0, window_bounds = array<i64: 2, 128, 4>}, {transform_indices = @transform_1, window_bounds = array<i64: 128, 38>}, {transform_indices = @transform_2, window_bounds = array<i64: 2, 128, 38>}]} {
    %c0 = arith.constant 0 : index
    %c0_0 = arith.constant 0 : index
    %0 = vector.load %arg3[%c0, %c0_0] : memref<128x38xf32, #tpu.memory_space<vmem>>, vector<128x38xf32>
    %1 = vector.shape_cast %0 : vector<128x38xf32> to vector<1x128x38xf32>
    %2 = vector.shape_cast %1 : vector<1x128x38xf32> to vector<1x128x38xf32>
    %3 = vector.broadcast %2 : vector<1x128x38xf32> to vector<2x128x38xf32>
    %c0_1 = arith.constant 0 : index
    %c0_2 = arith.constant 0 : index
    %c0_3 = arith.constant 0 : index
    %4 = vector.load %arg4[%c0_1, %c0_2, %c0_3] : memref<2x128x38xf32, #tpu.memory_space<vmem>>, vector<2x128x38xf32>
    tpu.vector_store %arg4[%c0_1, %c0_2, %c0_3], %3 {strides = array<i32>} : memref<2x128x38xf32, #tpu.memory_space<vmem>>, vector<2x128x38xf32>,
    %c0_4 = arith.constant 0 : index
    %c0_5 = arith.constant 0 : index
    %c0_6 = arith.constant 0 : index
    %5 = vector.load %arg2[%c0_4, %c0_5, %c0_6] : memref<2x128x4xf32, #tpu.memory_space<vmem>>, vector<2x128x4xf32>
    %c0_7 = arith.constant 0 : index
    %c0_8 = arith.constant 0 : index
    %c0_9 = arith.constant 0 : index
    %6 = vector.load %arg4[%c0_7, %c0_8, %c0_9] : memref<2x128x38xf32, #tpu.memory_space<vmem>>, vector<2x128x4xf32>
    tpu.vector_store %arg4[%c0_7, %c0_8, %c0_9], %5 {strides = array<i32>} : memref<2x128x38xf32, #tpu.memory_space<vmem>>, vector<2x128x4xf32>,
    return
  }
  func.func @transform_0(%arg0: i32, %arg1: i32) -> (i32, i32, i32) {
    %c0_i32 = arith.constant 0 : i32
    %c0_i32_0 = arith.constant 0 : i32
    return %arg1, %arg0, %c0_i32 : i32, i32, i32
  }
  func.func @transform_1(%arg0: i32, %arg1: i32) -> (i32, i32) {
    %c0_i32 = arith.constant 0 : i32
    %c0_i32_0 = arith.constant 0 : i32
    return %arg0, %c0_i32 : i32, i32
  }
  func.func @transform_2(%arg0: i32, %arg1: i32) -> (i32, i32, i32) {
    %c0_i32 = arith.constant 0 : i32
    %c0_i32_0 = arith.constant 0 : i32
    return %arg1, %arg0, %c0_i32 : i32, i32, i32
  }
}

</mosaic_0001>

<llo_original>
// kernel: tpu_custom_call.1
$region0: #{tpu_custom_call.1}
  #allocation0 [shape = 'u32[]', space=smem, size = 0x4, offset = 0x4, fixed_abs, tag = 'smem constant byte address 0x4 - core index']
  #allocation1 [shape = 'u32[72,128]{1,0:T(1,128)}', space=vmem, size = 0x9000, scoped, tag = 'internal scratch']
  %s0 = inlined_call_operand.vmem [shape: f32[2,256,4], index: 0, kind: input, shape index: {}]
  %s1 = inlined_call_operand.vmem [shape: f32[256,38], index: 1, kind: input, shape index: {}]
  %s2 = inlined_call_operand.vmem [shape: f32[2,256,38], index: 2, kind: output, shape index: {}]
  %s3 = sld [smem:[#allocation0]]
  $region113: #{tpu_custom_call.1} parent=0
    _
  %s5 = ssub.s32 1, %s3
  %s6 = scalar_select 0, %s5, %s3
  $region1: #{tpu_custom_call.1} parent=0
    #allocation2 [shape = 'u8[262144]{0}', space=vmem, size = 0x40000, scoped, tag = 'input window, operand 0']
    #allocation3 [shape = 'u8[262144]{0}', space=vmem, size = 0x40000, scoped, tag = 'output window, operand 0']
    loop: start=0, step=1, limit=4
    $region2: #{tpu_custom_call.1} parent=1 // loop_pre_header
      _
    $region3: #{tpu_custom_call.1} parent=1 // loop_header
      %s8 = sphi 0, %s12
      %p9 = scmp.ge.s32.totalorder %s8, 4
      %s15 = sphi 0, %s27
      %s16 = sphi 0, %s23
      %s17 = sphi 0, %s15
      %s18 = sphi 0, %s16
      %s19 = sphi 0, %s17
      %s20 = sphi 0, %s18
      %s32 = sphi 0, %s34
      %s35 = sphi 0, %s32
      %s36 = sphi 0, %s35
      %s52 = sphi 0, %s36
      %s58 = sphi 0, %s60
      %s61 = sphi 0, %s58
      %s62 = sphi 0, %s61
      %s78 = sphi 0, %s62
      %s86 = sphi 0, %s88
      %s89 = sphi 0, %s86
      %s90 = sphi 0, %s89
      %s106 = sphi 0, %s90
    $region4: #{tpu_custom_call.1} parent=1 // loop_header_branch
      %11 = sbr.rel (%p9) target = $region8
    $region5: #{tpu_custom_call.1} parent=1 // loop_body
      %s13 = ssub.s32 %s8, 1
      %s14 = ssub.s32 %s8, 2
      %s21 = sadd.s32 1, %s16
      %p22 = scmp.ge.s32.totalorder %s21, 1
      %s23 = scalar_select %p22, 0, %s21
      %s24 = sadd.s32 1, %s15
      %s25 = scalar_select %p22, %s24, %s15
      %p26 = scmp.ge.s32.totalorder %s25, 2
      %s27 = scalar_select %p26, 0, %s25
      %s28 = ssub.s32 %s16, %s23
      %s29 = ssub.s32 %s15, %s27
      %s30 = sor.u32 %s28, %s29
      %p31 = scmp.eq.s32.totalorder %s30, 0
      %s33 = sadd.s32 %s32, 1
      %s34 = scalar_select %p31, %s32, %s33
      %p37 = pneg %p31
      %p38 = scmp.eq.s32.totalorder %s8, 1
      %p39 = por %p37, %p38
      %p40 = scmp.ne.s32.totalorder %s32, %s35
      %p41 = scmp.eq.s32.totalorder %s8, 0
      %p42 = por %p40, %p41
      %p43 = scmp.ne.s32.totalorder %s32, %s35
      %p44 = scmp.eq.s32.totalorder %s13, 1
      %p45 = por %p43, %p44
      %p46 = scmp.ne.s32.totalorder %s35, %s36
      %p47 = scmp.eq.s32.totalorder %s13, 0
      %p48 = por %p46, %p47
      %p49 = scmp.ne.s32.totalorder %s35, %s36
      %p50 = scmp.eq.s32.totalorder %s14, 1
      %p51 = por %p49, %p50
      %p53 = scmp.ne.s32.totalorder %s36, %s52
      %p54 = scmp.eq.s32.totalorder %s14, 0
      %p55 = por %p53, %p54
      %s56 = ssub.s32 %s15, %s27
      %p57 = scmp.eq.s32.totalorder %s56, 0
      %s59 = sadd.s32 %s58, 1
      %s60 = scalar_select %p57, %s58, %s59
      %p63 = pneg %p57
      %p64 = scmp.eq.s32.totalorder %s8, 1
      %p65 = por %p63, %p64
      %p66 = scmp.ne.s32.totalorder %s58, %s61
      %p67 = scmp.eq.s32.totalorder %s8, 0
      %p68 = por %p66, %p67
      %p69 = scmp.ne.s32.totalorder %s58, %s61
      %p70 = scmp.eq.s32.totalorder %s13, 1
      %p71 = por %p69, %p70
      %p72 = scmp.ne.s32.totalorder %s61, %s62
      %p73 = scmp.eq.s32.totalorder %s13, 0
      %p74 = por %p72, %p73
      %p75 = scmp.ne.s32.totalorder %s61, %s62
      %p76 = scmp.eq.s32.totalorder %s14, 1
      %p77 = por %p75, %p76
      %p79 = scmp.ne.s32.totalorder %s62, %s78
      %p80 = scmp.eq.s32.totalorder %s14, 0
      %p81 = por %p79, %p80
      %s82 = ssub.s32 %s16, %s23
      %s83 = ssub.s32 %s15, %s27
      %s84 = sor.u32 %s82, %s83
      %p85 = scmp.eq.s32.totalorder %s84, 0
      %s87 = sadd.s32 %s86, 1
      %s88 = scalar_select %p85, %s86, %s87
      %p91 = pneg %p85
      %p92 = scmp.eq.s32.totalorder %s8, 1
      %p93 = por %p91, %p92
      %p94 = scmp.ne.s32.totalorder %s86, %s89
      %p95 = scmp.eq.s32.totalorder %s8, 0
      %p96 = por %p94, %p95
      %p97 = scmp.ne.s32.totalorder %s86, %s89
      %p98 = scmp.eq.s32.totalorder %s13, 1
      %p99 = por %p97, %p98
      %p100 = scmp.ne.s32.totalorder %s89, %s90
      %p101 = scmp.eq.s32.totalorder %s13, 0
      %p102 = por %p100, %p101
      %p103 = scmp.ne.s32.totalorder %s89, %s90
      %p104 = scmp.eq.s32.totalorder %s14, 1
      %p105 = por %p103, %p104
      %p107 = scmp.ne.s32.totalorder %s90, %s106
      %p108 = scmp.eq.s32.totalorder %s14, 0
      %p109 = por %p107, %p108
      %p110 = scmp.le.s32.totalorder 1, %s8
      %p111 = scmp.lt.s32.totalorder %s8, 3
      %p112 = pnand %p110, %p111
      %p113 = pneg %p112
      // Predicated region
      $region9: #{tpu_custom_call.1} parent=5 // pred_check
        _
      $region10: #{tpu_custom_call.1} parent=5 // pred_check_branch
        %115 = sbr.rel (%p112) target = $region12
      $region11: #{tpu_custom_call.1} parent=5 // pred_region
        %s116 = ssub.s32 %s8, 1
      $region12: #{tpu_custom_call.1} parent=5 // pred_fallthru
        _
      %p117 = scmp.lt.s32.totalorder %s8, 2
      // Predicated region
      $region13: #{tpu_custom_call.1} parent=5 // pred_check
        %p118 = pneg %p117
      $region14: #{tpu_custom_call.1} parent=5 // pred_check_branch
        %120 = sbr.rel (%p118) target = $region16
      $region15: #{tpu_custom_call.1} parent=5 // pred_region
        // Predicated region
        $region17: #{tpu_custom_call.1} parent=15 // pred_check
          %p121 = pneg %p42
        $region18: #{tpu_custom_call.1} parent=15 // pred_check_branch
          %123 = sbr.rel (%p121) target = $region20
        $region19: #{tpu_custom_call.1} parent=15 // pred_region
          %s124 = sand.u32 %s32, 1
          %s125 = sand.u32 %s32, 1
          %s126 = smul.addr %s125, 256
          %s127 = scalar_lea.vmem [#allocation2], %s126
          %s128 = smul.u32 2, %s16
          %s129 = smul.u32 16, %s15
          %s130 = smul.addr %s128, 32
          %s131 = sadd.s32 %s129, %s130
          %s132 = smul.addr %s131, 8
          %s133 = scalar_lea.vmem %s0, %s132
          // Predicated region
          $region21: #{tpu_custom_call.1} parent=19 // pred_check
            _
          $region22: #{tpu_custom_call.1} parent=19 // pred_check_branch
            %135 = sbr.rel (0) target = $region24
          $region23: #{tpu_custom_call.1} parent=19 // pred_region
            // Predicated region
            $region25: #{tpu_custom_call.1} parent=23 // pred_check
              _
            $region26: #{tpu_custom_call.1} parent=23 // pred_check_branch
              %137 = sbr.rel (0) target = $region28
            $region27: #{tpu_custom_call.1} parent=23 // pred_region
              // Predicated region
              $region40: #{tpu_custom_call.1} parent=27 // pred_check
                _
              $region41: #{tpu_custom_call.1} parent=27 // pred_check_branch
                %215 = sbr.rel (0) target = $region43
              $region42: #{tpu_custom_call.1} parent=27 // pred_region
                loop: start=0, step=1, limit=1
                $region44: #{tpu_custom_call.1} parent=42 // loop_pre_header
                  _
                $region45: #{tpu_custom_call.1} parent=42 // loop_header
                  %s217 = sphi 0, %s221
                  %p218 = scmp.ge.s32.totalorder %s217, 1
                  %s222 = sphi %s133, %s133
                  %s223 = sphi %s127, %s127
                $region46: #{tpu_custom_call.1} parent=42 // loop_header_branch
                  %220 = sbr.rel (%p218) target = $region50
                $region47: #{tpu_custom_call.1} parent=42 // loop_body
                  %v224 = vld [vmem:[%s222] sm:$0xff]
                  %225 = vst [vmem:[%s223] sm:$0xff] %v224
                  %v226 = vld [vmem:[%s222 + $0x8] sm:$0xff]
                  %227 = vst [vmem:[%s223 + $0x8] sm:$0xff] %v226
                  %v228 = vld [vmem:[%s222 + $0x10] sm:$0xff]
                  %229 = vst [vmem:[%s223 + $0x10] sm:$0xff] %v228
                  %v230 = vld [vmem:[%s222 + $0x18] sm:$0xff]
                  %231 = vst [vmem:[%s223 + $0x18] sm:$0xff] %v230
                  %v232 = vld [vmem:[%s222 + $0x20] sm:$0xff]
                  %233 = vst [vmem:[%s223 + $0x20] sm:$0xff] %v232
                  %v234 = vld [vmem:[%s222 + $0x28] sm:$0xff]
                  %235 = vst [vmem:[%s223 + $0x28] sm:$0xff] %v234
                  %v236 = vld [vmem:[%s222 + $0x30] sm:$0xff]
                  %237 = vst [vmem:[%s223 + $0x30] sm:$0xff] %v236
                  %v238 = vld [vmem:[%s222 + $0x38] sm:$0xff]
                  %239 = vst [vmem:[%s223 + $0x38] sm:$0xff] %v238
                  %v240 = vld [vmem:[%s222 + $0x40] sm:$0xff]
                  %241 = vst [vmem:[%s223 + $0x40] sm:$0xff] %v240
                  %v242 = vld [vmem:[%s222 + $0x48] sm:$0xff]
                  %243 = vst [vmem:[%s223 + $0x48] sm:$0xff] %v242
                  %v244 = vld [vmem:[%s222 + $0x50] sm:$0xff]
                  %245 = vst [vmem:[%s223 + $0x50] sm:$0xff] %v244
                  %v246 = vld [vmem:[%s222 + $0x58] sm:$0xff]
                  %247 = vst [vmem:[%s223 + $0x58] sm:$0xff] %v246
                  %v248 = vld [vmem:[%s222 + $0x60] sm:$0xff]
                  %249 = vst [vmem:[%s223 + $0x60] sm:$0xff] %v248
                  %v250 = vld [vmem:[%s222 + $0x68] sm:$0xff]
                  %251 = vst [vmem:[%s223 + $0x68] sm:$0xff] %v250
                  %v252 = vld [vmem:[%s222 + $0x70] sm:$0xff]
                  %253 = vst [vmem:[%s223 + $0x70] sm:$0xff] %v252
                  %v254 = vld [vmem:[%s222 + $0x78] sm:$0xff]
                  %255 = vst [vmem:[%s223 + $0x78] sm:$0xff] %v254
                  %v256 = vld [vmem:[%s222 + $0x100] sm:$0xff]
                  %257 = vst [vmem:[%s223 + $0x80] sm:$0xff] %v256
                  %v258 = vld [vmem:[%s222 + $0x108] sm:$0xff]
                  %259 = vst [vmem:[%s223 + $0x88] sm:$0xff] %v258
                  %v260 = vld [vmem:[%s222 + $0x110] sm:$0xff]
                  %261 = vst [vmem:[%s223 + $0x90] sm:$0xff] %v260
                  %v262 = vld [vmem:[%s222 + $0x118] sm:$0xff]
                  %263 = vst [vmem:[%s223 + $0x98] sm:$0xff] %v262
                  %v264 = vld [vmem:[%s222 + $0x120] sm:$0xff]
                  %265 = vst [vmem:[%s223 + $0xa0] sm:$0xff] %v264
                  %v266 = vld [vmem:[%s222 + $0x128] sm:$0xff]
                  %267 = vst [vmem:[%s223 + $0xa8] sm:$0xff] %v266
                  %v268 = vld [vmem:[%s222 + $0x130] sm:$0xff]
                  %269 = vst [vmem:[%s223 + $0xb0] sm:$0xff] %v268
                  %v270 = vld [vmem:[%s222 + $0x138] sm:$0xff]
                  %271 = vst [vmem:[%s223 + $0xb8] sm:$0xff] %v270
                  %v272 = vld [vmem:[%s222 + $0x140] sm:$0xff]
                  %273 = vst [vmem:[%s223 + $0xc0] sm:$0xff] %v272
                  %v274 = vld [vmem:[%s222 + $0x148] sm:$0xff]
                  %275 = vst [vmem:[%s223 + $0xc8] sm:$0xff] %v274
                  %v276 = vld [vmem:[%s222 + $0x150] sm:$0xff]
                  %277 = vst [vmem:[%s223 + $0xd0] sm:$0xff] %v276
                  %v278 = vld [vmem:[%s222 + $0x158] sm:$0xff]
                  %279 = vst [vmem:[%s223 + $0xd8] sm:$0xff] %v278
                  %v280 = vld [vmem:[%s222 + $0x160] sm:$0xff]
                  %281 = vst [vmem:[%s223 + $0xe0] sm:$0xff] %v280
                  %v282 = vld [vmem:[%s222 + $0x168] sm:$0xff]
                  %283 = vst [vmem:[%s223 + $0xe8] sm:$0xff] %v282
                  %v284 = vld [vmem:[%s222 + $0x170] sm:$0xff]
                  %285 = vst [vmem:[%s223 + $0xf0] sm:$0xff] %v284
                  %v286 = vld [vmem:[%s222 + $0x178] sm:$0xff]
                  %287 = vst [vmem:[%s223 + $0xf8] sm:$0xff] %v286
                $region48: #{tpu_custom_call.1} parent=42 // loop_footer
                  %s221 = sadd.s32 1, %s217
                $region49: #{tpu_custom_call.1} parent=42 // loop_footer_branch
                  %216 = sbr.rel target = $region45
                $region50: #{tpu_custom_call.1} parent=42 // loop_exit
                  _
              $region43: #{tpu_custom_call.1} parent=27 // pred_fallthru
                _
              // Predicated region
              $region51: #{tpu_custom_call.1} parent=27 // pred_check
                _
              $region52: #{tpu_custom_call.1} parent=27 // pred_check_branch
                %289 = sbr.rel target = $region54
              $region53: #{tpu_custom_call.1} parent=27 // pred_region
                _
              $region54: #{tpu_custom_call.1} parent=27 // pred_fallthru
                _
            $region28: #{tpu_custom_call.1} parent=23 // pred_fallthru
              _
            // Predicated region
            $region29: #{tpu_custom_call.1} parent=23 // pred_check
              _
            $region30: #{tpu_custom_call.1} parent=23 // pred_check_branch
              %139 = sbr.rel target = $region32
            $region31: #{tpu_custom_call.1} parent=23 // pred_region
              %s141 = ssub.s32 256, 1
              loop: start=0, step=1, limit=1
              $region33: #{tpu_custom_call.1} parent=31 // loop_pre_header
                _
              $region34: #{tpu_custom_call.1} parent=31 // loop_header
                %s143 = sphi 0, %s147
                %p144 = scmp.ge.s32.totalorder %s143, 1
                %s148 = sphi %s133, %s133
                %s149 = sphi %s127, %s127
              $region35: #{tpu_custom_call.1} parent=31 // loop_header_branch
                %146 = sbr.rel (%p144) target = $region39
              $region36: #{tpu_custom_call.1} parent=31 // loop_body
                %v150 = vld [vmem:[%s148] sm:%s141]
                %151 = vst [vmem:[%s149] sm:%s141] %v150
                %v152 = vld [vmem:[%s148 + $0x8] sm:%s141]
                %153 = vst [vmem:[%s149 + $0x8] sm:%s141] %v152
                %v154 = vld [vmem:[%s148 + $0x10] sm:%s141]
                %155 = vst [vmem:[%s149 + $0x10] sm:%s141] %v154
                %v156 = vld [vmem:[%s148 + $0x18] sm:%s141]
                %157 = vst [vmem:[%s149 + $0x18] sm:%s141] %v156
                %v158 = vld [vmem:[%s148 + $0x20] sm:%s141]
                %159 = vst [vmem:[%s149 + $0x20] sm:%s141] %v158
                %v160 = vld [vmem:[%s148 + $0x28] sm:%s141]
                %161 = vst [vmem:[%s149 + $0x28] sm:%s141] %v160
                %v162 = vld [vmem:[%s148 + $0x30] sm:%s141]
                %163 = vst [vmem:[%s149 + $0x30] sm:%s141] %v162
                %v164 = vld [vmem:[%s148 + $0x38] sm:%s141]
                %165 = vst [vmem:[%s149 + $0x38] sm:%s141] %v164
                %v166 = vld [vmem:[%s148 + $0x40] sm:%s141]
                %167 = vst [vmem:[%s149 + $0x40] sm:%s141] %v166
                %v168 = vld [vmem:[%s148 + $0x48] sm:%s141]
                %169 = vst [vmem:[%s149 + $0x48] sm:%s141] %v168
                %v170 = vld [vmem:[%s148 + $0x50] sm:%s141]
                %171 = vst [vmem:[%s149 + $0x50] sm:%s141] %v170
                %v172 = vld [vmem:[%s148 + $0x58] sm:%s141]
                %173 = vst [vmem:[%s149 + $0x58] sm:%s141] %v172
                %v174 = vld [vmem:[%s148 + $0x60] sm:%s141]
                %175 = vst [vmem:[%s149 + $0x60] sm:%s141] %v174
                %v176 = vld [vmem:[%s148 + $0x68] sm:%s141]
                %177 = vst [vmem:[%s149 + $0x68] sm:%s141] %v176
                %v178 = vld [vmem:[%s148 + $0x70] sm:%s141]
                %179 = vst [vmem:[%s149 + $0x70] sm:%s141] %v178
                %v180 = vld [vmem:[%s148 + $0x78] sm:%s141]
                %181 = vst [vmem:[%s149 + $0x78] sm:%s141] %v180
                %v182 = vld [vmem:[%s148 + $0x100] sm:%s141]
                %183 = vst [vmem:[%s149 + $0x80] sm:%s141] %v182
                %v184 = vld [vmem:[%s148 + $0x108] sm:%s141]
                %185 = vst [vmem:[%s149 + $0x88] sm:%s141] %v184
                %v186 = vld [vmem:[%s148 + $0x110] sm:%s141]
                %187 = vst [vmem:[%s149 + $0x90] sm:%s141] %v186
                %v188 = vld [vmem:[%s148 + $0x118] sm:%s141]
                %189 = vst [vmem:[%s149 + $0x98] sm:%s141] %v188
                %v190 = vld [vmem:[%s148 + $0x120] sm:%s141]
                %191 = vst [vmem:[%s149 + $0xa0] sm:%s141] %v190
                %v192 = vld [vmem:[%s148 + $0x128] sm:%s141]
                %193 = vst [vmem:[%s149 + $0xa8] sm:%s141] %v192
                %v194 = vld [vmem:[%s148 + $0x130] sm:%s141]
                %195 = vst [vmem:[%s149 + $0xb0] sm:%s141] %v194
                %v196 = vld [vmem:[%s148 + $0x138] sm:%s141]
                %197 = vst [vmem:[%s149 + $0xb8] sm:%s141] %v196
                %v198 = vld [vmem:[%s148 + $0x140] sm:%s141]
                %199 = vst [vmem:[%s149 + $0xc0] sm:%s141] %v198
                %v200 = vld [vmem:[%s148 + $0x148] sm:%s141]
                %201 = vst [vmem:[%s149 + $0xc8] sm:%s141] %v200
                %v202 = vld [vmem:[%s148 + $0x150] sm:%s141]
                %203 = vst [vmem:[%s149 + $0xd0] sm:%s141] %v202
                %v204 = vld [vmem:[%s148 + $0x158] sm:%s141]
                %205 = vst [vmem:[%s149 + $0xd8] sm:%s141] %v204
                %v206 = vld [vmem:[%s148 + $0x160] sm:%s141]
                %207 = vst [vmem:[%s149 + $0xe0] sm:%s141] %v206
                %v208 = vld [vmem:[%s148 + $0x168] sm:%s141]
                %209 = vst [vmem:[%s149 + $0xe8] sm:%s141] %v208
                %v210 = vld [vmem:[%s148 + $0x170] sm:%s141]
                %211 = vst [vmem:[%s149 + $0xf0] sm:%s141] %v210
                %v212 = vld [vmem:[%s148 + $0x178] sm:%s141]
                %213 = vst [vmem:[%s149 + $0xf8] sm:%s141] %v212
              $region37: #{tpu_custom_call.1} parent=31 // loop_footer
                %s147 = sadd.s32 1, %s143
              $region38: #{tpu_custom_call.1} parent=31 // loop_footer_branch
                %142 = sbr.rel target = $region34
              $region39: #{tpu_custom_call.1} parent=31 // loop_exit
                _
            $region32: #{tpu_custom_call.1} parent=23 // pred_fallthru
              _
          $region24: #{tpu_custom_call.1} parent=19 // pred_fallthru
            _
          %290 = vnop
        $region20: #{tpu_custom_call.1} parent=15 // pred_fallthru
          _
        // Predicated region
        $region55: #{tpu_custom_call.1} parent=15 // pred_check
          %p291 = pneg %p68
        $region56: #{tpu_custom_call.1} parent=15 // pred_check_branch
          %293 = sbr.rel (%p291) target = $region58
        $region57: #{tpu_custom_call.1} parent=15 // pred_region
          %s294 = smul.u32 16, %s15
          %p295 = scmp.lt.s32.totalorder %s294, 31
          %s296 = scalar_select %p295, %s294, 31
          %s297 = smul.addr %s296, 8
          %s298 = scalar_lea.vmem %s1, %s297
          %s299 = smul.u32 16, %s15
        $region58: #{tpu_custom_call.1} parent=15 // pred_fallthru
          _
      $region16: #{tpu_custom_call.1} parent=5 // pred_fallthru
        _
      %p300 = scmp.le.s32.totalorder 1, %s8
      %p301 = scmp.lt.s32.totalorder %s8, 3
      %p302 = pnand %p300, %p301
      %p303 = pneg %p302
      // Predicated region
      $region59: #{tpu_custom_call.1} parent=5 // pred_check
        _
      $region60: #{tpu_custom_call.1} parent=5 // pred_check_branch
        %305 = sbr.rel (%p302) target = $region62
      $region61: #{tpu_custom_call.1} parent=5 // pred_region
        %s306 = ssub.s32 %s8, 1
        %s307 = sand.u32 %s35, 1
        %s308 = sand.u32 %s35, 1
        %s309 = smul.addr %s308, 256
        %s310 = scalar_lea.vmem [#allocation2], %s309
        // Predicated region
        $region63: #{tpu_custom_call.1} parent=61 // pred_check
          %p311 = pneg %p48
        $region64: #{tpu_custom_call.1} parent=61 // pred_check_branch
          %313 = sbr.rel (%p311) target = $region66
        $region65: #{tpu_custom_call.1} parent=61 // pred_region
          _
        $region66: #{tpu_custom_call.1} parent=61 // pred_fallthru
          _
        %s314 = sand.u32 %s35, 1
        %s315 = sand.u32 %s35, 1
        %s316 = smul.addr %s315, 256
        %s317 = scalar_lea.vmem [#allocation2], %s316
        %p318 = pneg %p48
        %p319 = pneg %p45
        %s320 = smul.u32 16, %s17
        %p321 = scmp.lt.s32.totalorder %s320, 31
        %s322 = scalar_select %p321, %s320, 31
        %s323 = smul.addr %s322, 8
        %s324 = scalar_lea.vmem %s1, %s323
        %p325 = pneg %p74
        %p326 = pneg %p71
        %p327 = pneg %p102
        %p328 = pneg %p99
        %s329 = sand.u32 %s89, 1
        %s330 = sand.u32 %s89, 1
        %s331 = smul.addr %s330, 256
        %s332 = scalar_lea.vmem [#allocation3], %s331
        %s333 = smul.u32 2, %s18
        %s334 = smul.u32 16, %s17
        %s335 = smul.u32 16, %s17
        %p336 = scmp.lt.s32.totalorder %s335, 31
        %s337 = scalar_select %p336, %s335, 31
        %s338 = smul.addr %s337, 8
        %s339 = scalar_lea.vmem %s1, %s338
        %s340 = smul.u32 16, %s17
        %s341 = smul.u32 2, %s18
        %s342 = smul.u32 16, %s17
        %v343 = vld [vmem:[%s339] sm:$0xff]
        %v344 = vld [vmem:[%s339 + $0x8] sm:$0xff]
        %v345 = vld [vmem:[%s339 + $0x10] sm:$0xff]
        %v346 = vld [vmem:[%s339 + $0x18] sm:$0xff]
        %v347 = vld [vmem:[%s339 + $0x20] sm:$0xff]
        %v348 = vld [vmem:[%s339 + $0x28] sm:$0xff]
        %v349 = vld [vmem:[%s339 + $0x30] sm:$0xff]
        %v350 = vld [vmem:[%s339 + $0x38] sm:$0xff]
        %v351 = vld [vmem:[%s339 + $0x40] sm:$0xff]
        %v352 = vld [vmem:[%s339 + $0x48] sm:$0xff]
        %v353 = vld [vmem:[%s339 + $0x50] sm:$0xff]
        %v354 = vld [vmem:[%s339 + $0x58] sm:$0xff]
        %v355 = vld [vmem:[%s339 + $0x60] sm:$0xff]
        %v356 = vld [vmem:[%s339 + $0x68] sm:$0xff]
        %v357 = vld [vmem:[%s339 + $0x70] sm:$0xff]
        %v358 = vld [vmem:[%s339 + $0x78] sm:$0xff]
        %vm359 = vcmask 310272
        %360 = vst.msk [vmem:[%s332] sm:$0xff] %vm359, %v343
        %361 = vst.msk [vmem:[%s332 + $0x8] sm:$0xff] %vm359, %v344
        %362 = vst.msk [vmem:[%s332 + $0x10] sm:$0xff] %vm359, %v345
        %363 = vst.msk [vmem:[%s332 + $0x18] sm:$0xff] %vm359, %v346
        %364 = vst.msk [vmem:[%s332 + $0x20] sm:$0xff] %vm359, %v347
        %365 = vst.msk [vmem:[%s332 + $0x28] sm:$0xff] %vm359, %v348
        %366 = vst.msk [vmem:[%s332 + $0x30] sm:$0xff] %vm359, %v349
        %367 = vst.msk [vmem:[%s332 + $0x38] sm:$0xff] %vm359, %v350
        %368 = vst.msk [vmem:[%s332 + $0x40] sm:$0xff] %vm359, %v351
        %369 = vst.msk [vmem:[%s332 + $0x48] sm:$0xff] %vm359, %v352
        %370 = vst.msk [vmem:[%s332 + $0x50] sm:$0xff] %vm359, %v353
        %371 = vst.msk [vmem:[%s332 + $0x58] sm:$0xff] %vm359, %v354
        %372 = vst.msk [vmem:[%s332 + $0x60] sm:$0xff] %vm359, %v355
        %373 = vst.msk [vmem:[%s332 + $0x68] sm:$0xff] %vm359, %v356
        %374 = vst.msk [vmem:[%s332 + $0x70] sm:$0xff] %vm359, %v357
        %375 = vst.msk [vmem:[%s332 + $0x78] sm:$0xff] %vm359, %v358
        %376 = vst.msk [vmem:[%s332 + $0x80] sm:$0xff] %vm359, %v343
        %377 = vst.msk [vmem:[%s332 + $0x88] sm:$0xff] %vm359, %v344
        %378 = vst.msk [vmem:[%s332 + $0x90] sm:$0xff] %vm359, %v345
        %379 = vst.msk [vmem:[%s332 + $0x98] sm:$0xff] %vm359, %v346
        %380 = vst.msk [vmem:[%s332 + $0xa0] sm:$0xff] %vm359, %v347
        %381 = vst.msk [vmem:[%s332 + $0xa8] sm:$0xff] %vm359, %v348
        %382 = vst.msk [vmem:[%s332 + $0xb0] sm:$0xff] %vm359, %v349
        %383 = vst.msk [vmem:[%s332 + $0xb8] sm:$0xff] %vm359, %v350
        %384 = vst.msk [vmem:[%s332 + $0xc0] sm:$0xff] %vm359, %v351
        %385 = vst.msk [vmem:[%s332 + $0xc8] sm:$0xff] %vm359, %v352
        %386 = vst.msk [vmem:[%s332 + $0xd0] sm:$0xff] %vm359, %v353
        %387 = vst.msk [vmem:[%s332 + $0xd8] sm:$0xff] %vm359, %v354
        %388 = vst.msk [vmem:[%s332 + $0xe0] sm:$0xff] %vm359, %v355
        %389 = vst.msk [vmem:[%s332 + $0xe8] sm:$0xff] %vm359, %v356
        %390 = vst.msk [vmem:[%s332 + $0xf0] sm:$0xff] %vm359, %v357
        %391 = vst.msk [vmem:[%s332 + $0xf8] sm:$0xff] %vm359, %v358
        %v392 = vld [vmem:[%s310] sm:$0xff]
        %v393 = vld [vmem:[%s310 + $0x8] sm:$0xff]
        %v394 = vld [vmem:[%s310 + $0x10] sm:$0xff]
        %v395 = vld [vmem:[%s310 + $0x18] sm:$0xff]
        %v396 = vld [vmem:[%s310 + $0x20] sm:$0xff]
        %v397 = vld [vmem:[%s310 + $0x28] sm:$0xff]
        %v398 = vld [vmem:[%s310 + $0x30] sm:$0xff]
        %v399 = vld [vmem:[%s310 + $0x38] sm:$0xff]
        %v400 = vld [vmem:[%s310 + $0x40] sm:$0xff]
        %v401 = vld [vmem:[%s310 + $0x48] sm:$0xff]
        %v402 = vld [vmem:[%s310 + $0x50] sm:$0xff]
        %v403 = vld [vmem:[%s310 + $0x58] sm:$0xff]
        %v404 = vld [vmem:[%s310 + $0x60] sm:$0xff]
        %v405 = vld [vmem:[%s310 + $0x68] sm:$0xff]
        %v406 = vld [vmem:[%s310 + $0x70] sm:$0xff]
        %v407 = vld [vmem:[%s310 + $0x78] sm:$0xff]
        %v408 = vld [vmem:[%s310 + $0x80] sm:$0xff]
        %v409 = vld [vmem:[%s310 + $0x88] sm:$0xff]
        %v410 = vld [vmem:[%s310 + $0x90] sm:$0xff]
        %v411 = vld [vmem:[%s310 + $0x98] sm:$0xff]
        %v412 = vld [vmem:[%s310 + $0xa0] sm:$0xff]
        %v413 = vld [vmem:[%s310 + $0xa8] sm:$0xff]
        %v414 = vld [vmem:[%s310 + $0xb0] sm:$0xff]
        %v415 = vld [vmem:[%s310 + $0xb8] sm:$0xff]
        %v416 = vld [vmem:[%s310 + $0xc0] sm:$0xff]
        %v417 = vld [vmem:[%s310 + $0xc8] sm:$0xff]
        %v418 = vld [vmem:[%s310 + $0xd0] sm:$0xff]
        %v419 = vld [vmem:[%s310 + $0xd8] sm:$0xff]
        %v420 = vld [vmem:[%s310 + $0xe0] sm:$0xff]
        %v421 = vld [vmem:[%s310 + $0xe8] sm:$0xff]
        %v422 = vld [vmem:[%s310 + $0xf0] sm:$0xff]
        %v423 = vld [vmem:[%s310 + $0xf8] sm:$0xff]
        %vm424 = vcmask 31744
        %425 = vst.msk [vmem:[%s332] sm:$0xff] %vm424, %v392
        %426 = vst.msk [vmem:[%s332 + $0x8] sm:$0xff] %vm424, %v393
        %427 = vst.msk [vmem:[%s332 + $0x10] sm:$0xff] %vm424, %v394
        %428 = vst.msk [vmem:[%s332 + $0x18] sm:$0xff] %vm424, %v395
        %429 = vst.msk [vmem:[%s332 + $0x20] sm:$0xff] %vm424, %v396
        %430 = vst.msk [vmem:[%s332 + $0x28] sm:$0xff] %vm424, %v397
        %431 = vst.msk [vmem:[%s332 + $0x30] sm:$0xff] %vm424, %v398
        %432 = vst.msk [vmem:[%s332 + $0x38] sm:$0xff] %vm424, %v399
        %433 = vst.msk [vmem:[%s332 + $0x40] sm:$0xff] %vm424, %v400
        %434 = vst.msk [vmem:[%s332 + $0x48] sm:$0xff] %vm424, %v401
        %435 = vst.msk [vmem:[%s332 + $0x50] sm:$0xff] %vm424, %v402
        %436 = vst.msk [vmem:[%s332 + $0x58] sm:$0xff] %vm424, %v403
        %437 = vst.msk [vmem:[%s332 + $0x60] sm:$0xff] %vm424, %v404
        %438 = vst.msk [vmem:[%s332 + $0x68] sm:$0xff] %vm424, %v405
        %439 = vst.msk [vmem:[%s332 + $0x70] sm:$0xff] %vm424, %v406
        %440 = vst.msk [vmem:[%s332 + $0x78] sm:$0xff] %vm424, %v407
        %441 = vst.msk [vmem:[%s332 + $0x80] sm:$0xff] %vm424, %v408
        %442 = vst.msk [vmem:[%s332 + $0x88] sm:$0xff] %vm424, %v409
        %443 = vst.msk [vmem:[%s332 + $0x90] sm:$0xff] %vm424, %v410
        %444 = vst.msk [vmem:[%s332 + $0x98] sm:$0xff] %vm424, %v411
        %445 = vst.msk [vmem:[%s332 + $0xa0] sm:$0xff] %vm424, %v412
        %446 = vst.msk [vmem:[%s332 + $0xa8] sm:$0xff] %vm424, %v413
        %447 = vst.msk [vmem:[%s332 + $0xb0] sm:$0xff] %vm424, %v414
        %448 = vst.msk [vmem:[%s332 + $0xb8] sm:$0xff] %vm424, %v415
        %449 = vst.msk [vmem:[%s332 + $0xc0] sm:$0xff] %vm424, %v416
        %450 = vst.msk [vmem:[%s332 + $0xc8] sm:$0xff] %vm424, %v417
        %451 = vst.msk [vmem:[%s332 + $0xd0] sm:$0xff] %vm424, %v418
        %452 = vst.msk [vmem:[%s332 + $0xd8] sm:$0xff] %vm424, %v419
        %453 = vst.msk [vmem:[%s332 + $0xe0] sm:$0xff] %vm424, %v420
        %454 = vst.msk [vmem:[%s332 + $0xe8] sm:$0xff] %vm424, %v421
        %455 = vst.msk [vmem:[%s332 + $0xf0] sm:$0xff] %vm424, %v422
        %456 = vst.msk [vmem:[%s332 + $0xf8] sm:$0xff] %vm424, %v423
        %s457 = sand.u32 %s89, 1
        %s458 = sand.u32 %s89, 1
        %s459 = smul.addr %s458, 256
        %s460 = scalar_lea.vmem [#allocation3], %s459
        // Predicated region
        $region67: #{tpu_custom_call.1} parent=61 // pred_check
          %p461 = pneg %p99
        $region68: #{tpu_custom_call.1} parent=61 // pred_check_branch
          %463 = sbr.rel (%p461) target = $region70
        $region69: #{tpu_custom_call.1} parent=61 // pred_region
          %s464 = smul.u32 2, %s18
          %s465 = smul.u32 16, %s17
          %s466 = smul.addr %s464, 32
          %s467 = sadd.s32 %s465, %s466
          %s468 = smul.addr %s467, 8
          %s469 = scalar_lea.vmem %s2, %s468
          // Predicated region
          $region71: #{tpu_custom_call.1} parent=69 // pred_check
            _
          $region72: #{tpu_custom_call.1} parent=69 // pred_check_branch
            %471 = sbr.rel (0) target = $region74
          $region73: #{tpu_custom_call.1} parent=69 // pred_region
            // Predicated region
            $region75: #{tpu_custom_call.1} parent=73 // pred_check
              _
            $region76: #{tpu_custom_call.1} parent=73 // pred_check_branch
              %473 = sbr.rel (0) target = $region78
            $region77: #{tpu_custom_call.1} parent=73 // pred_region
              // Predicated region
              $region90: #{tpu_custom_call.1} parent=77 // pred_check
                _
              $region91: #{tpu_custom_call.1} parent=77 // pred_check_branch
                %551 = sbr.rel (0) target = $region93
              $region92: #{tpu_custom_call.1} parent=77 // pred_region
                loop: start=0, step=1, limit=1
                $region94: #{tpu_custom_call.1} parent=92 // loop_pre_header
                  _
                $region95: #{tpu_custom_call.1} parent=92 // loop_header
                  %s553 = sphi 0, %s557
                  %p554 = scmp.ge.s32.totalorder %s553, 1
                  %s558 = sphi %s460, %s460
                  %s559 = sphi %s469, %s469
                $region96: #{tpu_custom_call.1} parent=92 // loop_header_branch
                  %556 = sbr.rel (%p554) target = $region100
                $region97: #{tpu_custom_call.1} parent=92 // loop_body
                  %v560 = vld [vmem:[%s558] sm:$0xff]
                  %561 = vst [vmem:[%s559] sm:$0xff] %v560
                  %v562 = vld [vmem:[%s558 + $0x8] sm:$0xff]
                  %563 = vst [vmem:[%s559 + $0x8] sm:$0xff] %v562
                  %v564 = vld [vmem:[%s558 + $0x10] sm:$0xff]
                  %565 = vst [vmem:[%s559 + $0x10] sm:$0xff] %v564
                  %v566 = vld [vmem:[%s558 + $0x18] sm:$0xff]
                  %567 = vst [vmem:[%s559 + $0x18] sm:$0xff] %v566
                  %v568 = vld [vmem:[%s558 + $0x20] sm:$0xff]
                  %569 = vst [vmem:[%s559 + $0x20] sm:$0xff] %v568
                  %v570 = vld [vmem:[%s558 + $0x28] sm:$0xff]
                  %571 = vst [vmem:[%s559 + $0x28] sm:$0xff] %v570
                  %v572 = vld [vmem:[%s558 + $0x30] sm:$0xff]
                  %573 = vst [vmem:[%s559 + $0x30] sm:$0xff] %v572
                  %v574 = vld [vmem:[%s558 + $0x38] sm:$0xff]
                  %575 = vst [vmem:[%s559 + $0x38] sm:$0xff] %v574
                  %v576 = vld [vmem:[%s558 + $0x40] sm:$0xff]
                  %577 = vst [vmem:[%s559 + $0x40] sm:$0xff] %v576
                  %v578 = vld [vmem:[%s558 + $0x48] sm:$0xff]
                  %579 = vst [vmem:[%s559 + $0x48] sm:$0xff] %v578
                  %v580 = vld [vmem:[%s558 + $0x50] sm:$0xff]
                  %581 = vst [vmem:[%s559 + $0x50] sm:$0xff] %v580
                  %v582 = vld [vmem:[%s558 + $0x58] sm:$0xff]
                  %583 = vst [vmem:[%s559 + $0x58] sm:$0xff] %v582
                  %v584 = vld [vmem:[%s558 + $0x60] sm:$0xff]
                  %585 = vst [vmem:[%s559 + $0x60] sm:$0xff] %v584
                  %v586 = vld [vmem:[%s558 + $0x68] sm:$0xff]
                  %587 = vst [vmem:[%s559 + $0x68] sm:$0xff] %v586
                  %v588 = vld [vmem:[%s558 + $0x70] sm:$0xff]
                  %589 = vst [vmem:[%s559 + $0x70] sm:$0xff] %v588
                  %v590 = vld [vmem:[%s558 + $0x78] sm:$0xff]
                  %591 = vst [vmem:[%s559 + $0x78] sm:$0xff] %v590
                  %v592 = vld [vmem:[%s558 + $0x80] sm:$0xff]
                  %593 = vst [vmem:[%s559 + $0x100] sm:$0xff] %v592
                  %v594 = vld [vmem:[%s558 + $0x88] sm:$0xff]
                  %595 = vst [vmem:[%s559 + $0x108] sm:$0xff] %v594
                  %v596 = vld [vmem:[%s558 + $0x90] sm:$0xff]
                  %597 = vst [vmem:[%s559 + $0x110] sm:$0xff] %v596
                  %v598 = vld [vmem:[%s558 + $0x98] sm:$0xff]
                  %599 = vst [vmem:[%s559 + $0x118] sm:$0xff] %v598
                  %v600 = vld [vmem:[%s558 + $0xa0] sm:$0xff]
                  %601 = vst [vmem:[%s559 + $0x120] sm:$0xff] %v600
                  %v602 = vld [vmem:[%s558 + $0xa8] sm:$0xff]
                  %603 = vst [vmem:[%s559 + $0x128] sm:$0xff] %v602
                  %v604 = vld [vmem:[%s558 + $0xb0] sm:$0xff]
                  %605 = vst [vmem:[%s559 + $0x130] sm:$0xff] %v604
                  %v606 = vld [vmem:[%s558 + $0xb8] sm:$0xff]
                  %607 = vst [vmem:[%s559 + $0x138] sm:$0xff] %v606
                  %v608 = vld [vmem:[%s558 + $0xc0] sm:$0xff]
                  %609 = vst [vmem:[%s559 + $0x140] sm:$0xff] %v608
                  %v610 = vld [vmem:[%s558 + $0xc8] sm:$0xff]
                  %611 = vst [vmem:[%s559 + $0x148] sm:$0xff] %v610
                  %v612 = vld [vmem:[%s558 + $0xd0] sm:$0xff]
                  %613 = vst [vmem:[%s559 + $0x150] sm:$0xff] %v612
                  %v614 = vld [vmem:[%s558 + $0xd8] sm:$0xff]
                  %615 = vst [vmem:[%s559 + $0x158] sm:$0xff] %v614
                  %v616 = vld [vmem:[%s558 + $0xe0] sm:$0xff]
                  %617 = vst [vmem:[%s559 + $0x160] sm:$0xff] %v616
                  %v618 = vld [vmem:[%s558 + $0xe8] sm:$0xff]
                  %619 = vst [vmem:[%s559 + $0x168] sm:$0xff] %v618
                  %v620 = vld [vmem:[%s558 + $0xf0] sm:$0xff]
                  %621 = vst [vmem:[%s559 + $0x170] sm:$0xff] %v620
                  %v622 = vld [vmem:[%s558 + $0xf8] sm:$0xff]
                  %623 = vst [vmem:[%s559 + $0x178] sm:$0xff] %v622
                $region98: #{tpu_custom_call.1} parent=92 // loop_footer
                  %s557 = sadd.s32 1, %s553
                $region99: #{tpu_custom_call.1} parent=92 // loop_footer_branch
                  %552 = sbr.rel target = $region95
                $region100: #{tpu_custom_call.1} parent=92 // loop_exit
                  _
              $region93: #{tpu_custom_call.1} parent=77 // pred_fallthru
                _
              // Predicated region
              $region101: #{tpu_custom_call.1} parent=77 // pred_check
                _
              $region102: #{tpu_custom_call.1} parent=77 // pred_check_branch
                %625 = sbr.rel target = $region104
              $region103: #{tpu_custom_call.1} parent=77 // pred_region
                _
              $region104: #{tpu_custom_call.1} parent=77 // pred_fallthru
                _
            $region78: #{tpu_custom_call.1} parent=73 // pred_fallthru
              _
            // Predicated region
            $region79: #{tpu_custom_call.1} parent=73 // pred_check
              _
            $region80: #{tpu_custom_call.1} parent=73 // pred_check_branch
              %475 = sbr.rel target = $region82
            $region81: #{tpu_custom_call.1} parent=73 // pred_region
              %s477 = ssub.s32 256, 1
              loop: start=0, step=1, limit=1
              $region83: #{tpu_custom_call.1} parent=81 // loop_pre_header
                _
              $region84: #{tpu_custom_call.1} parent=81 // loop_header
                %s479 = sphi 0, %s483
                %p480 = scmp.ge.s32.totalorder %s479, 1
                %s484 = sphi %s460, %s460
                %s485 = sphi %s469, %s469
              $region85: #{tpu_custom_call.1} parent=81 // loop_header_branch
                %482 = sbr.rel (%p480) target = $region89
              $region86: #{tpu_custom_call.1} parent=81 // loop_body
                %v486 = vld [vmem:[%s484] sm:%s477]
                %487 = vst [vmem:[%s485] sm:%s477] %v486
                %v488 = vld [vmem:[%s484 + $0x8] sm:%s477]
                %489 = vst [vmem:[%s485 + $0x8] sm:%s477] %v488
                %v490 = vld [vmem:[%s484 + $0x10] sm:%s477]
                %491 = vst [vmem:[%s485 + $0x10] sm:%s477] %v490
                %v492 = vld [vmem:[%s484 + $0x18] sm:%s477]
                %493 = vst [vmem:[%s485 + $0x18] sm:%s477] %v492
                %v494 = vld [vmem:[%s484 + $0x20] sm:%s477]
                %495 = vst [vmem:[%s485 + $0x20] sm:%s477] %v494
                %v496 = vld [vmem:[%s484 + $0x28] sm:%s477]
                %497 = vst [vmem:[%s485 + $0x28] sm:%s477] %v496
                %v498 = vld [vmem:[%s484 + $0x30] sm:%s477]
                %499 = vst [vmem:[%s485 + $0x30] sm:%s477] %v498
                %v500 = vld [vmem:[%s484 + $0x38] sm:%s477]
                %501 = vst [vmem:[%s485 + $0x38] sm:%s477] %v500
                %v502 = vld [vmem:[%s484 + $0x40] sm:%s477]
                %503 = vst [vmem:[%s485 + $0x40] sm:%s477] %v502
                %v504 = vld [vmem:[%s484 + $0x48] sm:%s477]
                %505 = vst [vmem:[%s485 + $0x48] sm:%s477] %v504
                %v506 = vld [vmem:[%s484 + $0x50] sm:%s477]
                %507 = vst [vmem:[%s485 + $0x50] sm:%s477] %v506
                %v508 = vld [vmem:[%s484 + $0x58] sm:%s477]
                %509 = vst [vmem:[%s485 + $0x58] sm:%s477] %v508
                %v510 = vld [vmem:[%s484 + $0x60] sm:%s477]
                %511 = vst [vmem:[%s485 + $0x60] sm:%s477] %v510
                %v512 = vld [vmem:[%s484 + $0x68] sm:%s477]
                %513 = vst [vmem:[%s485 + $0x68] sm:%s477] %v512
                %v514 = vld [vmem:[%s484 + $0x70] sm:%s477]
                %515 = vst [vmem:[%s485 + $0x70] sm:%s477] %v514
                %v516 = vld [vmem:[%s484 + $0x78] sm:%s477]
                %517 = vst [vmem:[%s485 + $0x78] sm:%s477] %v516
                %v518 = vld [vmem:[%s484 + $0x80] sm:%s477]
                %519 = vst [vmem:[%s485 + $0x100] sm:%s477] %v518
                %v520 = vld [vmem:[%s484 + $0x88] sm:%s477]
                %521 = vst [vmem:[%s485 + $0x108] sm:%s477] %v520
                %v522 = vld [vmem:[%s484 + $0x90] sm:%s477]
                %523 = vst [vmem:[%s485 + $0x110] sm:%s477] %v522
                %v524 = vld [vmem:[%s484 + $0x98] sm:%s477]
                %525 = vst [vmem:[%s485 + $0x118] sm:%s477] %v524
                %v526 = vld [vmem:[%s484 + $0xa0] sm:%s477]
                %527 = vst [vmem:[%s485 + $0x120] sm:%s477] %v526
                %v528 = vld [vmem:[%s484 + $0xa8] sm:%s477]
                %529 = vst [vmem:[%s485 + $0x128] sm:%s477] %v528
                %v530 = vld [vmem:[%s484 + $0xb0] sm:%s477]
                %531 = vst [vmem:[%s485 + $0x130] sm:%s477] %v530
                %v532 = vld [vmem:[%s484 + $0xb8] sm:%s477]
                %533 = vst [vmem:[%s485 + $0x138] sm:%s477] %v532
                %v534 = vld [vmem:[%s484 + $0xc0] sm:%s477]
                %535 = vst [vmem:[%s485 + $0x140] sm:%s477] %v534
                %v536 = vld [vmem:[%s484 + $0xc8] sm:%s477]
                %537 = vst [vmem:[%s485 + $0x148] sm:%s477] %v536
                %v538 = vld [vmem:[%s484 + $0xd0] sm:%s477]
                %539 = vst [vmem:[%s485 + $0x150] sm:%s477] %v538
                %v540 = vld [vmem:[%s484 + $0xd8] sm:%s477]
                %541 = vst [vmem:[%s485 + $0x158] sm:%s477] %v540
                %v542 = vld [vmem:[%s484 + $0xe0] sm:%s477]
                %543 = vst [vmem:[%s485 + $0x160] sm:%s477] %v542
                %v544 = vld [vmem:[%s484 + $0xe8] sm:%s477]
                %545 = vst [vmem:[%s485 + $0x168] sm:%s477] %v544
                %v546 = vld [vmem:[%s484 + $0xf0] sm:%s477]
                %547 = vst [vmem:[%s485 + $0x170] sm:%s477] %v546
                %v548 = vld [vmem:[%s484 + $0xf8] sm:%s477]
                %549 = vst [vmem:[%s485 + $0x178] sm:%s477] %v548
              $region87: #{tpu_custom_call.1} parent=81 // loop_footer
                %s483 = sadd.s32 1, %s479
              $region88: #{tpu_custom_call.1} parent=81 // loop_footer_branch
                %478 = sbr.rel target = $region84
              $region89: #{tpu_custom_call.1} parent=81 // loop_exit
                _
            $region82: #{tpu_custom_call.1} parent=73 // pred_fallthru
              _
          $region74: #{tpu_custom_call.1} parent=69 // pred_fallthru
            _
          %626 = vnop
        $region70: #{tpu_custom_call.1} parent=61 // pred_fallthru
          _
      $region62: #{tpu_custom_call.1} parent=5 // pred_fallthru
        _
      %p627 = scmp.le.s32.totalorder 2, %s8
      // Predicated region
      $region105: #{tpu_custom_call.1} parent=5 // pred_check
        %p628 = pneg %p627
      $region106: #{tpu_custom_call.1} parent=5 // pred_check_branch
        %630 = sbr.rel (%p628) target = $region108
      $region107: #{tpu_custom_call.1} parent=5 // pred_region
        %s631 = ssub.s32 %s8, 2
        // Predicated region
        $region109: #{tpu_custom_call.1} parent=107 // pred_check
          %p632 = pneg %p105
        $region110: #{tpu_custom_call.1} parent=107 // pred_check_branch
          %634 = sbr.rel (%p632) target = $region112
        $region111: #{tpu_custom_call.1} parent=107 // pred_region
          %s635 = sand.u32 %s90, 1
          %s636 = sand.u32 %s90, 1
          %s637 = smul.addr %s636, 256
          %s638 = scalar_lea.vmem [#allocation3], %s637
        $region112: #{tpu_custom_call.1} parent=107 // pred_fallthru
          _
      $region108: #{tpu_custom_call.1} parent=5 // pred_fallthru
        _
    $region6: #{tpu_custom_call.1} parent=1 // loop_footer
      %s12 = sadd.s32 1, %s8
    $region7: #{tpu_custom_call.1} parent=1 // loop_footer_branch
      %7 = sbr.rel target = $region3
    $region8: #{tpu_custom_call.1} parent=1 // loop_exit
      _

</llo_original>
